<compile_context>
chip_gen: v7x
topology: tpu7x:2x2x1
jax: 0.10.0
libtpu: 0.0.40
codegen_flags: <defaults>
</compile_context>

<pallas_src>
import functools
from collections import namedtuple

import jax
import jax.numpy as jnp
from jax.experimental import pallas as pl
from jax.experimental.pallas import tpu as pltpu

graph_result = namedtuple(
    "graph_result",
    ["logits", "loss", "last_hidden_state", "cluster_size", "cluster_ratio"],
)


def _round_up(x, m):
    return ((x + m - 1) // m) * m


def _oracle_kernel(scatter_val, gold_ref, t_ref, o_ref):
    # t_ref: (TB, C) in the input dtype; compute in f32.
    t = t_ref[...].astype(jnp.float32)
    tb, c = t.shape
    gold = gold_ref[...]                                     # (TB, 1) i32
    col = jax.lax.broadcasted_iota(jnp.int32, (tb, c), 1)
    # scatter_(1, gold, scalar C): put C at column gold[i] of row i.
    scattered = jnp.where(col == gold, jnp.float32(scatter_val), t)
    # Numerically stable softmax along dim=1 (lanes).
    m = jnp.max(scattered, axis=1, keepdims=True)
    e = jnp.exp(scattered - m)
    denom = jnp.sum(e, axis=1, keepdims=True)
    o_ref[...] = (e * pl.reciprocal(denom, approx=False)).astype(o_ref.dtype)


def test_oracle2_forward(t, gold, *, vmem_limit_bytes=48 * 1024 * 1024,
                         target_tile_bytes=4 * 1024 * 1024):
    """t: (B, C) float (any float dtype), gold: (B,) int -> graph_result(logits)."""
    B, C = t.shape
    scatter_val = float(C)

    in_bytes = jnp.dtype(t.dtype).itemsize
    out_bytes = in_bytes  # output in the input dtype (torch.softmax preserves dtype)

    # Per-row VMEM cost for one grid step:
    #   input block  (double-buffered)      : 2 * C * in_bytes
    #   output block (double-buffered)      : 2 * C * out_bytes
    #   f32 elementwise temporaries (astype, scattered, e), single-buffered
    #                                        : ~3 * C * 4
    #   gold block (tiny)                    : 2 * 4
    bytes_per_row = 2 * C * in_bytes + 2 * C * out_bytes + 3 * C * 4 + 2 * 4
    budget = int(vmem_limit_bytes * 0.7)        # headroom for compiler scratch
    tb_fit = (budget // bytes_per_row) // 8 * 8
    # TODO(synk): for vocab-scale C where even 8 rows overflow VMEM, add a
    # class-dim "arbitrary" grid axis with an online-softmax accumulator.
    tb_fit = max(8, tb_fit)

    # Target ~target_tile_bytes of input per grid step to amortize per-step cost.
    tb_target = max(8, (target_tile_bytes // max(1, C * in_bytes)) // 8 * 8)
    TB = max(8, min(tb_fit, tb_target))

    # Keep at least 2 grid steps when B permits (lets "parallel" shard the row
    # axis across v7x's two TensorCores) and never exceed the rounded-up batch.
    if B >= 16:
        TB = min(TB, _round_up((B + 1) // 2, 8))
    TB = max(8, min(TB, _round_up(B, 8)))

    gold2d = gold.reshape(B, 1).astype(jnp.int32)
    kernel = functools.partial(_oracle_kernel, scatter_val)

    logits = pl.pallas_call(
        kernel,
        out_shape=jax.ShapeDtypeStruct((B, C), t.dtype),
        grid=(pl.cdiv(B, TB),),
        in_specs=[
            pl.BlockSpec((TB, 1), lambda i: (i, 0)),
            pl.BlockSpec((TB, C), lambda i: (i, 0)),
        ],
        out_specs=pl.BlockSpec((TB, C), lambda i: (i, 0)),
        compiler_params=pltpu.CompilerParams(
            dimension_semantics=("parallel",),
            vmem_limit_bytes=vmem_limit_bytes,
        ),
    )(gold2d, t)

    return graph_result(
        logits=logits,
        loss=None,
        last_hidden_state=None,
        cluster_size=None,
        cluster_ratio=None,
    )


if __name__ == "__main__":
    key = jax.random.PRNGKey(0)
    k_t, k_g = jax.random.split(key)

    # Small aligned case, f32.
    B, C = 8, 128
    t = jax.random.normal(k_t, (B, C), dtype=jnp.float32)
    gold = jax.random.randint(k_g, (B,), 0, C, dtype=jnp.int32)

    out = test_oracle2_forward(t, gold)
    logits = jax.block_until_ready(out.logits)

    scattered = t.at[jnp.arange(B), gold].set(jnp.float32(C))
    ref = jax.nn.softmax(scattered, axis=1)
    assert logits.shape == (B, C) and logits.dtype == t.dtype
    assert jnp.allclose(logits, ref, atol=1e-6, rtol=1e-6)
    assert jnp.allclose(jnp.sum(logits, axis=1), 1.0, atol=1e-5)

    # Unaligned batch (ragged last grid block, 2 grid steps) and non-128 class
    # dim, bf16 input -> bf16 output.
    B2, C2 = 37, 200
    t2 = jax.random.normal(k_t, (B2, C2), dtype=jnp.bfloat16)
    gold2 = jax.random.randint(k_g, (B2,), 0, C2, dtype=jnp.int32)
    out2 = jax.block_until_ready(test_oracle2_forward(t2, gold2).logits)
    sc2 = t2.astype(jnp.float32).at[jnp.arange(B2), gold2].set(jnp.float32(C2))
    ref2 = jax.nn.softmax(sc2, axis=1)
    assert out2.shape == (B2, C2) and out2.dtype == jnp.bfloat16
    assert jnp.allclose(out2.astype(jnp.float32), ref2, atol=1e-2, rtol=5e-2)
    assert jnp.allclose(jnp.sum(out2.astype(jnp.float32), axis=1), 1.0, atol=3e-2)

    print("KERNEL_OK")
</pallas_src>

<mosaic_0001>
module attributes {stable_mosaic.version = 11 : i64} {
  func.func @_oracle_kernel(%arg0: i32, %arg1: memref<8x1xi32, #tpu.memory_space<vmem>>, %arg2: memref<8x128xf32, #tpu.memory_space<vmem>>, %arg3: memref<8x128xf32, #tpu.memory_space<vmem>>) attributes {dimension_semantics = [#tpu.dimension_semantics<parallel>], iteration_bounds = array<i64: 1>, scalar_prefetch = 0 : i64, scratch_operands = 0 : i64, tpu.core_type = #tpu.core_type<tc>, window_params = [{transform_indices = @transform_0, window_bounds = array<i64: 8, 1>}, {transform_indices = @transform_1, window_bounds = array<i64: 8, 128>}, {transform_indices = @transform_2, window_bounds = array<i64: 8, 128>}]} {
    %c0 = arith.constant 0 : index
    %c0_0 = arith.constant 0 : index
    %0 = vector.load %arg2[%c0, %c0_0] : memref<8x128xf32, #tpu.memory_space<vmem>>, vector<8x128xf32>
    %c0_1 = arith.constant 0 : index
    %c0_2 = arith.constant 0 : index
    %1 = vector.load %arg1[%c0_1, %c0_2] : memref<8x1xi32, #tpu.memory_space<vmem>>, vector<8x1xi32>
    %2 = tpu.iota {dimensions = array<i32: 1>} : vector<8x128xi32>
    %3 = vector.broadcast %1 : vector<8x1xi32> to vector<8x128xi32>
    %4 = arith.cmpi eq, %2, %3 : vector<8x128xi32>
    %cst = arith.constant 1.280000e+02 : f32
    %5 = vector.broadcast %cst : f32 to vector<8x128xf32>
    %6 = arith.select %4, %5, %0 : vector<8x128xi1>, vector<8x128xf32>
    %cst_3 = arith.constant dense<0xFF800000> : vector<8xf32>
    %7 = vector.multi_reduction <maximumf>, %6, %cst_3 [1] : vector<8x128xf32> to vector<8xf32>
    %8 = vector.shape_cast %7 : vector<8xf32> to vector<8x1xf32>
    %9 = vector.broadcast %8 : vector<8x1xf32> to vector<8x128xf32>
    %10 = arith.subf %6, %9 : vector<8x128xf32>
    %11 = math.exp %10 : vector<8x128xf32>
    %cst_4 = arith.constant dense<0.000000e+00> : vector<8xf32>
    %12 = vector.multi_reduction <add>, %11, %cst_4 [1] : vector<8x128xf32> to vector<8xf32>
    %13 = vector.shape_cast %12 : vector<8xf32> to vector<8x1xf32>
    %14 = tpu.reciprocal %13 : vector<8x1xf32> -> vector<8x1xf32>
    %15 = vector.broadcast %14 : vector<8x1xf32> to vector<8x128xf32>
    %16 = arith.mulf %11, %15 : vector<8x128xf32>
    %c0_5 = arith.constant 0 : index
    %c0_6 = arith.constant 0 : index
    %17 = vector.load %arg3[%c0_5, %c0_6] : memref<8x128xf32, #tpu.memory_space<vmem>>, vector<8x128xf32>
    tpu.vector_store %arg3[%c0_5, %c0_6], %16 {strides = array<i32>} : memref<8x128xf32, #tpu.memory_space<vmem>>, vector<8x128xf32>,
    return
  }
  func.func @transform_0(%arg0: i32) -> (i32, i32) {
    %c0_i32 = arith.constant 0 : i32
    %c0_i32_0 = arith.constant 0 : i32
    return %arg0, %c0_i32 : i32, i32
  }
  func.func @transform_1(%arg0: i32) -> (i32, i32) {
    %c0_i32 = arith.constant 0 : i32
    %c0_i32_0 = arith.constant 0 : i32
    return %arg0, %c0_i32 : i32, i32
  }
  func.func @transform_2(%arg0: i32) -> (i32, i32) {
    %c0_i32 = arith.constant 0 : i32
    %c0_i32_0 = arith.constant 0 : i32
    return %arg0, %c0_i32 : i32, i32
  }
}

</mosaic_0001>

<llo_original>
// kernel: tpu_custom_call.1
$region0: #{tpu_custom_call.1}
  #allocation0 [shape = 'u32[]', space=smem, size = 0x4, offset = 0x4, fixed_abs, tag = 'smem constant byte address 0x4 - core index']
  #allocation1 [shape = 'u32[144,128]{1,0:T(1,128)}', space=vmem, size = 0x12000, scoped, tag = 'internal scratch']
  %s0 = inlined_call_operand.vmem [shape: s32[8,1], index: 0, kind: input, shape index: {}]
  %s1 = inlined_call_operand.vmem [shape: f32[8,128], index: 1, kind: input, shape index: {}]
  %s2 = inlined_call_operand.hbm [shape: f32[8,128], index: 2, kind: output, shape index: {}]
  %s3 = sld [smem:[#allocation0]]
  $region18: #{tpu_custom_call.1} parent=0
    _
  %s5 = ssub.s32 1, %s3
  %s6 = scalar_select 0, %s5, %s3
  $region1: #{tpu_custom_call.1} parent=0
    #allocation2 [shape = 'u8[4096]{0}', space=vmem, size = 0x1000, scoped, tag = 'output window, operand 0, single buffered']
    #allocation3 [shape = 's32[1]{0}', space=sflag, size = 0x4, scoped, tag = 'scoped memory for tpu_custom_call.1']
    %7 = vsyncpa [#allocation3], 0
    // Predicated region
    $region2: #{tpu_custom_call.1} parent=1 // pred_check
      _
    $region3: #{tpu_custom_call.1} parent=1 // pred_check_branch
      %9 = sbr.rel (0) target = $region5
    $region4: #{tpu_custom_call.1} parent=1 // pred_region
      _
    $region5: #{tpu_custom_call.1} parent=1 // pred_fallthru
      _
    // Predicated region
    $region6: #{tpu_custom_call.1} parent=1 // pred_check
      _
    $region7: #{tpu_custom_call.1} parent=1 // pred_check_branch
      %11 = sbr.rel (0) target = $region9
    $region8: #{tpu_custom_call.1} parent=1 // pred_region
      _
    $region9: #{tpu_custom_call.1} parent=1 // pred_fallthru
      _
    %v12 = vld [vmem:[%s1] sm:$0xff]
    %v13 = vld [vmem:[%s0] sm:$0xff]
    %v14 = vlaneseq
    %v15 = vand.u32 %v14, 127
    %16 = vset.pattern.permute.xlu0 0
    %17 = vperm.xlu0 %16, %v13
    %v18 = vpop.permute.xlu0 %17
    %vm19 = vcmp.eq.s32.totalorder %v15, %v18
    %v20 = vsel %vm19, 128.0, %v12
    %21 = vmax.xlane.f32.xlu0 %v20
    %v22 = vpop.xlane.xlu0 %21
    %v23 = vsub.f32 %v20, %v22
    %v24 = vmul.f32 %v23, 1.442695
    %v25 = vpow.pop %v24
    %26 = vadd.xlane.f32.xlu0 %v25
    %v27 = vpop.xlane.xlu0 %26
    %v28 = vrcp.pop %v27
    %v29 = vmul.f32 %v25, %v28
    %30 = vst [vmem:[#allocation2] sm:$0xff] %v29
    // Predicated region
    $region10: #{tpu_custom_call.1} parent=1 // pred_check
      _
    $region11: #{tpu_custom_call.1} parent=1 // pred_check_branch
      %32 = sbr.rel (0) target = $region13
    $region12: #{tpu_custom_call.1} parent=1 // pred_region
      %s34 = ssub.s32 128, 128
      %35 = vsyncadd [#allocation3], %s34
      %s37 = sshll.u32 [#allocation2], 4
      %s38 = int_to_ptr.vmem [resolvable:$true] %s37
      %40 = dma.vmem_to_hbm [thread:$0]  %s38, 128, %s2, [#allocation3]
    $region13: #{tpu_custom_call.1} parent=1 // pred_fallthru
      _
    // Predicated region
    $region14: #{tpu_custom_call.1} parent=1 // pred_check
      _
    $region15: #{tpu_custom_call.1} parent=1 // pred_check_branch
      %42 = sbr.rel (0) target = $region17
    $region16: #{tpu_custom_call.1} parent=1 // pred_region
      %43 = dma.done [#allocation3], 128
    $region17: #{tpu_custom_call.1} parent=1 // pred_fallthru
      _
    %44 = vsyncpa [#allocation3], 1

</llo_original>
